<compile_context>
chip_gen: v7x
topology: tpu7x:2x2x1
jax: 0.10.0
libtpu: 0.0.40
codegen_flags: <defaults>
</compile_context>

<pallas_src>
import functools
import math

import jax
import jax.numpy as jnp
from jax.experimental import pallas as pl
from jax.experimental.pallas import tpu as pltpu


def _arcface_kernel(y_pred_ref, y_true_ref, delta_ref, lse_ref, l_scr, *, scale):
    j = pl.program_id(1)
    tb, tc = y_pred_ref.shape

    @pl.when(j == 0)
    def _():
        l_scr[...] = jnp.zeros(l_scr.shape, dtype=jnp.float32)

    # Clip in the input dtype (bf16 stays packed on v6e/v7x), then upcast.
    y = jnp.clip(y_pred_ref[...], -1.0, 1.0).astype(jnp.float32)      # (tb, tc)

    # Cheap target mask: per-row localized label vs a (1, tc) lane iota.
    local_label = y_true_ref[...] - j * tc                            # (tb, 1)
    iota_row = jax.lax.broadcasted_iota(jnp.int32, (1, tc), 1)        # (1, tc)
    mask = iota_row == local_label                                    # (tb, tc)

    # Only the target column moves, by the wrapper-precomputed delta.
    y_mod = y + jnp.where(mask, delta_ref[...], 0.0)                  # (tb, tc)

    # Static-shift log-sum-exp accumulation: y_mod <= 1 so exponent <= 0.
    l_scr[...] += jnp.sum(jnp.exp((y_mod - 1.0) * scale),
                          axis=1, keepdims=True)                      # (tb, 1)

    @pl.when(j == pl.num_programs(1) - 1)
    def _():
        lse_ref[...] = scale + jnp.log(l_scr[...])


def _pick_block_b(b):
    # Divisors of b that are multiples of 8, capped at 256; prefer >= 2 tiles
    # so the "parallel" batch axis can shard across v7x's two TensorCores.
    cands = [k for k in range(8, min(b, 256) + 1, 8) if b % k == 0]
    if not cands:
        return b
    multi = [k for k in cands if b // k >= 2]
    return max(multi) if multi else max(cands)


def _pick_block_c(c):
    if c <= 4096:
        return c
    for k in (4096, 2048, 1024, 512, 256, 128):
        if c % k == 0:
            return k
    return c


def arcface_loss(y_pred, y_true, *, margin=0.5, scale=30.0,
                 block_b=None, block_c=None):
    """ArcFace loss.

    y_pred: (B, C) cosine logits (f32 or bf16 -- bf16 halves the dominant DMA),
    y_true: (B,) integer labels.  Requires C > 1 (the PyTorch max-quirk form).
    """
    b, c = y_pred.shape
    assert c > 1
    margin = float(margin)
    scale = float(scale)
    # Static LSE shift (= scale) is safe only while exp(-2*scale) stays in f32.
    assert scale <= 80.0, "static-shift LSE assumes scale <= 80"

    if block_b is None:
        block_b = _pick_block_b(b)
    if block_c is None:
        block_c = _pick_block_c(c)
    assert b % block_b == 0 and c % block_c == 0, (b, c, block_b, block_c)
    assert block_b == b or block_b % 8 == 0
    assert block_c == c or block_c % 128 == 0

    y_true2d = y_true.astype(jnp.int32).reshape(b, 1)

    # Wrapper-side target extraction (B*4 bytes) + the acos/cos margin math,
    # faithfully reproducing the PyTorch quirk logits = max(y*onehot, axis=1)
    # == max(y_t, 0) for C > 1.
    y_t = jnp.clip(
        jnp.take_along_axis(y_pred, y_true2d, axis=1).astype(jnp.float32),
        -1.0, 1.0)                                                    # (B, 1)
    quirk = jnp.maximum(y_t, 0.0)
    cos_m, sin_m = math.cos(margin), math.sin(margin)
    sin_theta = jnp.sqrt(jnp.maximum(1.0 - quirk * quirk, 0.0))
    # cos(acos(q) + m) - q  with acos(q) in [0, pi/2]  (always <= 0 for m>=0)
    delta = quirk * cos_m - sin_theta * sin_m - quirk                 # (B, 1)
    target_scaled = (y_t + delta) * scale                             # (B, 1)

    grid = (b // block_b, c // block_c)

    lse = pl.pallas_call(
        functools.partial(_arcface_kernel, scale=scale),
        out_shape=jax.ShapeDtypeStruct((b, 1), jnp.float32),
        grid_spec=pltpu.PrefetchScalarGridSpec(
            num_scalar_prefetch=0,
            grid=grid,
            in_specs=[
                pl.BlockSpec((block_b, block_c), lambda i, j: (i, j)),
                pl.BlockSpec((block_b, 1), lambda i, j: (i, 0)),
                pl.BlockSpec((block_b, 1), lambda i, j: (i, 0)),
            ],
            out_specs=pl.BlockSpec((block_b, 1), lambda i, j: (i, 0)),
            scratch_shapes=[pltpu.VMEM((block_b, 1), jnp.float32)],
        ),
        compiler_params=pltpu.CompilerParams(
            dimension_semantics=("parallel", "arbitrary"),
            vmem_limit_bytes=48 * 1024 * 1024),
    )(y_pred, y_true2d, delta)

    # per-example CE = logsumexp(row) - scaled target logit; mean over batch
    # (F.cross_entropy default reduction).
    return jnp.mean(lse - target_scaled)


if __name__ == "__main__":
    N_CLASSES = 512
    BATCH = 16
    MARGIN = 0.5
    SCALE = 30.0

    key = jax.random.PRNGKey(0)
    k_pred, k_lbl = jax.random.split(key)

    # Synthetic cosine-similarity logits in [-1, 1] and integer labels.
    y_pred = jax.random.uniform(k_pred, (BATCH, N_CLASSES), jnp.float32,
                                minval=-1.0, maxval=1.0)
    y_true = jax.random.randint(k_lbl, (BATCH,), 0, N_CLASSES, dtype=jnp.int32)

    # Small tiles so the (batch, class) grid and the LSE accumulation are
    # exercised (2 batch tiles x 4 class tiles).
    loss = arcface_loss(y_pred, y_true, margin=MARGIN, scale=SCALE,
                        block_b=8, block_c=128)
    jax.block_until_ready(loss)

    # Pure-JAX reference of the exact PyTorch forward math (incl. the max quirk).
    def ref(y_pred, y_true):
        y = jnp.clip(y_pred, -1.0, 1.0)
        onehot = jax.nn.one_hot(y_true, N_CLASSES, dtype=jnp.float32)
        logits = jnp.max(y * onehot, axis=1, keepdims=True)
        theta = jnp.arccos(logits)
        y2 = (jnp.cos(theta + MARGIN) - logits) * onehot + y
        y2 = y2 * SCALE
        logp = jax.nn.log_softmax(y2, axis=1)
        return -jnp.mean(jnp.sum(logp * onehot, axis=1))

    ref_loss = ref(y_pred, y_true)
    assert jnp.allclose(loss, ref_loss, atol=1e-3, rtol=1e-4), (loss, ref_loss)

    print("KERNEL_OK")
</pallas_src>

<mosaic_0001>
module attributes {stable_mosaic.version = 11 : i64} {
  func.func @_arcface_kernel(%arg0: i32, %arg1: i32, %arg2: memref<8x128xf32, #tpu.memory_space<vmem>>, %arg3: memref<8x1xi32, #tpu.memory_space<vmem>>, %arg4: memref<8x1xf32, #tpu.memory_space<vmem>>, %arg5: memref<8x1xf32, #tpu.memory_space<vmem>>, %arg6: memref<8x1xf32, #tpu.memory_space<vmem>>) attributes {dimension_semantics = [#tpu.dimension_semantics<parallel>, #tpu.dimension_semantics<arbitrary>], iteration_bounds = array<i64: 2, 4>, scalar_prefetch = 0 : i64, scratch_operands = 1 : i64, tpu.core_type = #tpu.core_type<tc>, window_params = [{transform_indices = @transform_0, window_bounds = array<i64: 8, 128>}, {transform_indices = @transform_1, window_bounds = array<i64: 8, 1>}, {transform_indices = @transform_2, window_bounds = array<i64: 8, 1>}, {transform_indices = @transform_3, window_bounds = array<i64: 8, 1>}]} {
    %c0_i32 = arith.constant 0 : i32
    %0 = arith.cmpi eq, %arg1, %c0_i32 : i32
    %1 = arith.extui %0 : i1 to i32
    %c0_i32_0 = arith.constant 0 : i32
    %2 = arith.cmpi ne, %1, %c0_i32_0 : i32
    scf.if %2 {
      %cst_16 = arith.constant 0.000000e+00 : f32
      %35 = vector.broadcast %cst_16 : f32 to vector<8x1xf32>
      %c0_17 = arith.constant 0 : index
      %c0_18 = arith.constant 0 : index
      %36 = vector.load %arg6[%c0_17, %c0_18] : memref<8x1xf32, #tpu.memory_space<vmem>>, vector<8x1xf32>
      tpu.vector_store %arg6[%c0_17, %c0_18], %35 {strides = array<i32>} : memref<8x1xf32, #tpu.memory_space<vmem>>, vector<8x1xf32>,
    } else {
    }
    %c0 = arith.constant 0 : index
    %c0_1 = arith.constant 0 : index
    %3 = vector.load %arg2[%c0, %c0_1] : memref<8x128xf32, #tpu.memory_space<vmem>>, vector<8x128xf32>
    %cst = arith.constant -1.000000e+00 : f32
    %cst_2 = arith.constant 1.000000e+00 : f32
    %4 = vector.broadcast %cst : f32 to vector<8x128xf32>
    %5 = arith.maximumf %4, %3 : vector<8x128xf32>
    %6 = vector.broadcast %cst_2 : f32 to vector<8x128xf32>
    %7 = arith.minimumf %6, %5 : vector<8x128xf32>
    %c0_3 = arith.constant 0 : index
    %c0_4 = arith.constant 0 : index
    %8 = vector.load %arg3[%c0_3, %c0_4] : memref<8x1xi32, #tpu.memory_space<vmem>>, vector<8x1xi32>
    %c128_i32 = arith.constant 128 : i32
    %9 = arith.muli %arg1, %c128_i32 : i32
    %10 = vector.broadcast %9 : i32 to vector<8x1xi32>
    %11 = arith.subi %8, %10 : vector<8x1xi32>
    %12 = tpu.iota {dimensions = array<i32: 1>} : vector<1x128xi32>
    %13 = vector.broadcast %12 : vector<1x128xi32> to vector<8x128xi32>
    %14 = vector.broadcast %11 : vector<8x1xi32> to vector<8x128xi32>
    %15 = arith.cmpi eq, %13, %14 : vector<8x128xi32>
    %c0_5 = arith.constant 0 : index
    %c0_6 = arith.constant 0 : index
    %16 = vector.load %arg4[%c0_5, %c0_6] : memref<8x1xf32, #tpu.memory_space<vmem>>, vector<8x1xf32>
    %cst_7 = arith.constant 0.000000e+00 : f32
    %17 = vector.shape_cast %16 : vector<8x1xf32> to vector<8x1xf32>
    %18 = vector.broadcast %17 : vector<8x1xf32> to vector<8x128xf32>
    %19 = vector.broadcast %cst_7 : f32 to vector<8x128xf32>
    %20 = arith.select %15, %18, %19 : vector<8x128xi1>, vector<8x128xf32>
    %21 = arith.addf %7, %20 : vector<8x128xf32>
    %c0_8 = arith.constant 0 : index
    %c0_9 = arith.constant 0 : index
    %22 = vector.load %arg6[%c0_8, %c0_9] : memref<8x1xf32, #tpu.memory_space<vmem>>, vector<8x1xf32>
    %cst_10 = arith.constant 1.000000e+00 : f32
    %23 = vector.broadcast %cst_10 : f32 to vector<8x128xf32>
    %24 = arith.subf %21, %23 : vector<8x128xf32>
    %cst_11 = arith.constant 3.000000e+01 : f32
    %25 = vector.broadcast %cst_11 : f32 to vector<8x128xf32>
    %26 = arith.mulf %24, %25 : vector<8x128xf32>
    %27 = math.exp %26 : vector<8x128xf32>
    %cst_12 = arith.constant dense<0.000000e+00> : vector<8xf32>
    %28 = vector.multi_reduction <add>, %27, %cst_12 [1] : vector<8x128xf32> to vector<8xf32>
    %29 = vector.shape_cast %28 : vector<8xf32> to vector<8x1xf32>
    %30 = arith.addf %22, %29 : vector<8x1xf32>
    %c0_13 = arith.constant 0 : index
    %c0_14 = arith.constant 0 : index
    %31 = vector.load %arg6[%c0_13, %c0_14] : memref<8x1xf32, #tpu.memory_space<vmem>>, vector<8x1xf32>
    tpu.vector_store %arg6[%c0_13, %c0_14], %30 {strides = array<i32>} : memref<8x1xf32, #tpu.memory_space<vmem>>, vector<8x1xf32>,
    %c3_i32 = arith.constant 3 : i32
    %32 = arith.cmpi eq, %arg1, %c3_i32 : i32
    %33 = arith.extui %32 : i1 to i32
    %c0_i32_15 = arith.constant 0 : i32
    %34 = arith.cmpi ne, %33, %c0_i32_15 : i32
    scf.if %34 {
      %c0_16 = arith.constant 0 : index
      %c0_17 = arith.constant 0 : index
      %35 = vector.load %arg6[%c0_16, %c0_17] : memref<8x1xf32, #tpu.memory_space<vmem>>, vector<8x1xf32>
      %36 = math.log %35 : vector<8x1xf32>
      %cst_18 = arith.constant 3.000000e+01 : f32
      %37 = vector.broadcast %cst_18 : f32 to vector<8x1xf32>
      %38 = arith.addf %37, %36 : vector<8x1xf32>
      %c0_19 = arith.constant 0 : index
      %c0_20 = arith.constant 0 : index
      %39 = vector.load %arg5[%c0_19, %c0_20] : memref<8x1xf32, #tpu.memory_space<vmem>>, vector<8x1xf32>
      tpu.vector_store %arg5[%c0_19, %c0_20], %38 {strides = array<i32>} : memref<8x1xf32, #tpu.memory_space<vmem>>, vector<8x1xf32>,
    } else {
    }
    return
  }
  func.func @transform_0(%arg0: i32, %arg1: i32) -> (i32, i32) {
    %c0_i32 = arith.constant 0 : i32
    return %arg0, %arg1 : i32, i32
  }
  func.func @transform_1(%arg0: i32, %arg1: i32) -> (i32, i32) {
    %c0_i32 = arith.constant 0 : i32
    %c0_i32_0 = arith.constant 0 : i32
    return %arg0, %c0_i32 : i32, i32
  }
  func.func @transform_2(%arg0: i32, %arg1: i32) -> (i32, i32) {
    %c0_i32 = arith.constant 0 : i32
    %c0_i32_0 = arith.constant 0 : i32
    return %arg0, %c0_i32 : i32, i32
  }
  func.func @transform_3(%arg0: i32, %arg1: i32) -> (i32, i32) {
    %c0_i32 = arith.constant 0 : i32
    %c0_i32_0 = arith.constant 0 : i32
    return %arg0, %c0_i32 : i32, i32
  }
}

</mosaic_0001>

<llo_original>
// kernel: tpu_custom_call.1
$region0: #{tpu_custom_call.1}
  #allocation0 [shape = 'u32[]', space=smem, size = 0x4, offset = 0x4, fixed_abs, tag = 'smem constant byte address 0x4 - core index']
  #allocation1 [shape = 'u32[144,128]{1,0:T(1,128)}', space=vmem, size = 0x12000, scoped, tag = 'internal scratch']
  #allocation2 [shape = 'f32[8,1]{1,0:T(8,128)}', space=vmem, size = 0x1000, scoped, tag = 'scratch operand']
  %s0 = inlined_call_operand.hbm [shape: f32[16,512], index: 0, kind: input, shape index: {}]
  %s1 = inlined_call_operand.vmem [shape: s32[16,1], index: 1, kind: input, shape index: {}]
  %s2 = inlined_call_operand.vmem [shape: f32[16,1], index: 2, kind: input, shape index: {}]
  %s3 = inlined_call_operand.vmem [shape: f32[16,1], index: 3, kind: output, shape index: {}]
  %s4 = sld [smem:[#allocation0]]
  $region57: #{tpu_custom_call.1} parent=0
    _
  %s6 = ssub.s32 1, %s4
  %s7 = scalar_select 0, %s6, %s4
  $region1: #{tpu_custom_call.1} parent=0
    #allocation3 [shape = 'u8[8192]{0}', space=vmem, size = 0x2000, scoped, tag = 'input window, operand 0']
    #allocation4 [shape = 's32[2]{0}', space=sflag, size = 0x8, scoped, tag = 'scoped memory for tpu_custom_call.1']
    %8 = vsyncpa [#allocation4], 0
    %s9 = scalar_lea.sflag [#allocation4], 1
    %10 = vsyncpa %s9, 0
    loop: start=0, step=1, limit=10
    $region2: #{tpu_custom_call.1} parent=1 // loop_pre_header
      _
    $region3: #{tpu_custom_call.1} parent=1 // loop_header
      %s12 = sphi 0, %s16
      %p13 = scmp.ge.s32.totalorder %s12, 10
      %s19 = sphi 0, %s31
      %s20 = sphi 0, %s27
      %s21 = sphi 0, %s19
      %s22 = sphi 0, %s20
      %s23 = sphi 0, %s21
      %s24 = sphi 0, %s22
      %s36 = sphi 0, %s38
      %s39 = sphi 0, %s36
      %s40 = sphi 0, %s39
      %s56 = sphi 0, %s40
      %s62 = sphi 0, %s64
      %s65 = sphi 0, %s62
      %s66 = sphi 0, %s65
      %s82 = sphi 0, %s66
      %s88 = sphi 0, %s90
      %s91 = sphi 0, %s88
      %s92 = sphi 0, %s91
      %s108 = sphi 0, %s92
      %s114 = sphi 0, %s116
      %s117 = sphi 0, %s114
      %s118 = sphi 0, %s117
      %s134 = sphi 0, %s118
    $region4: #{tpu_custom_call.1} parent=1 // loop_header_branch
      %15 = sbr.rel (%p13) target = $region8
    $region5: #{tpu_custom_call.1} parent=1 // loop_body
      %s17 = ssub.s32 %s12, 1
      %s18 = ssub.s32 %s12, 2
      %s25 = sadd.s32 1, %s20
      %p26 = scmp.ge.s32.totalorder %s25, 4
      %s27 = scalar_select %p26, 0, %s25
      %s28 = sadd.s32 1, %s19
      %s29 = scalar_select %p26, %s28, %s19
      %p30 = scmp.ge.s32.totalorder %s29, 2
      %s31 = scalar_select %p30, 0, %s29
      %s32 = ssub.s32 %s19, %s31
      %s33 = ssub.s32 %s20, %s27
      %s34 = sor.u32 %s32, %s33
      %p35 = scmp.eq.s32.totalorder %s34, 0
      %s37 = sadd.s32 %s36, 1
      %s38 = scalar_select %p35, %s36, %s37
      %p41 = pneg %p35
      %p42 = scmp.eq.s32.totalorder %s12, 7
      %p43 = por %p41, %p42
      %p44 = scmp.ne.s32.totalorder %s36, %s39
      %p45 = scmp.eq.s32.totalorder %s12, 0
      %p46 = por %p44, %p45
      %p47 = scmp.ne.s32.totalorder %s36, %s39
      %p48 = scmp.eq.s32.totalorder %s17, 7
      %p49 = por %p47, %p48
      %p50 = scmp.ne.s32.totalorder %s39, %s40
      %p51 = scmp.eq.s32.totalorder %s17, 0
      %p52 = por %p50, %p51
      %p53 = scmp.ne.s32.totalorder %s39, %s40
      %p54 = scmp.eq.s32.totalorder %s18, 7
      %p55 = por %p53, %p54
      %p57 = scmp.ne.s32.totalorder %s40, %s56
      %p58 = scmp.eq.s32.totalorder %s18, 0
      %p59 = por %p57, %p58
      %s60 = ssub.s32 %s19, %s31
      %p61 = scmp.eq.s32.totalorder %s60, 0
      %s63 = sadd.s32 %s62, 1
      %s64 = scalar_select %p61, %s62, %s63
      %p67 = pneg %p61
      %p68 = scmp.eq.s32.totalorder %s12, 7
      %p69 = por %p67, %p68
      %p70 = scmp.ne.s32.totalorder %s62, %s65
      %p71 = scmp.eq.s32.totalorder %s12, 0
      %p72 = por %p70, %p71
      %p73 = scmp.ne.s32.totalorder %s62, %s65
      %p74 = scmp.eq.s32.totalorder %s17, 7
      %p75 = por %p73, %p74
      %p76 = scmp.ne.s32.totalorder %s65, %s66
      %p77 = scmp.eq.s32.totalorder %s17, 0
      %p78 = por %p76, %p77
      %p79 = scmp.ne.s32.totalorder %s65, %s66
      %p80 = scmp.eq.s32.totalorder %s18, 7
      %p81 = por %p79, %p80
      %p83 = scmp.ne.s32.totalorder %s66, %s82
      %p84 = scmp.eq.s32.totalorder %s18, 0
      %p85 = por %p83, %p84
      %s86 = ssub.s32 %s19, %s31
      %p87 = scmp.eq.s32.totalorder %s86, 0
      %s89 = sadd.s32 %s88, 1
      %s90 = scalar_select %p87, %s88, %s89
      %p93 = pneg %p87
      %p94 = scmp.eq.s32.totalorder %s12, 7
      %p95 = por %p93, %p94
      %p96 = scmp.ne.s32.totalorder %s88, %s91
      %p97 = scmp.eq.s32.totalorder %s12, 0
      %p98 = por %p96, %p97
      %p99 = scmp.ne.s32.totalorder %s88, %s91
      %p100 = scmp.eq.s32.totalorder %s17, 7
      %p101 = por %p99, %p100
      %p102 = scmp.ne.s32.totalorder %s91, %s92
      %p103 = scmp.eq.s32.totalorder %s17, 0
      %p104 = por %p102, %p103
      %p105 = scmp.ne.s32.totalorder %s91, %s92
      %p106 = scmp.eq.s32.totalorder %s18, 7
      %p107 = por %p105, %p106
      %p109 = scmp.ne.s32.totalorder %s92, %s108
      %p110 = scmp.eq.s32.totalorder %s18, 0
      %p111 = por %p109, %p110
      %s112 = ssub.s32 %s19, %s31
      %p113 = scmp.eq.s32.totalorder %s112, 0
      %s115 = sadd.s32 %s114, 1
      %s116 = scalar_select %p113, %s114, %s115
      %p119 = pneg %p113
      %p120 = scmp.eq.s32.totalorder %s12, 7
      %p121 = por %p119, %p120
      %p122 = scmp.ne.s32.totalorder %s114, %s117
      %p123 = scmp.eq.s32.totalorder %s12, 0
      %p124 = por %p122, %p123
      %p125 = scmp.ne.s32.totalorder %s114, %s117
      %p126 = scmp.eq.s32.totalorder %s17, 7
      %p127 = por %p125, %p126
      %p128 = scmp.ne.s32.totalorder %s117, %s118
      %p129 = scmp.eq.s32.totalorder %s17, 0
      %p130 = por %p128, %p129
      %p131 = scmp.ne.s32.totalorder %s117, %s118
      %p132 = scmp.eq.s32.totalorder %s18, 7
      %p133 = por %p131, %p132
      %p135 = scmp.ne.s32.totalorder %s118, %s134
      %p136 = scmp.eq.s32.totalorder %s18, 0
      %p137 = por %p135, %p136
      %p138 = scmp.le.s32.totalorder 1, %s12
      %p139 = scmp.lt.s32.totalorder %s12, 9
      %p140 = pnand %p138, %p139
      %p141 = pneg %p140
      // Predicated region
      $region9: #{tpu_custom_call.1} parent=5 // pred_check
        _
      $region10: #{tpu_custom_call.1} parent=5 // pred_check_branch
        %143 = sbr.rel (%p140) target = $region12
      $region11: #{tpu_custom_call.1} parent=5 // pred_region
        %s144 = ssub.s32 %s12, 1
      $region12: #{tpu_custom_call.1} parent=5 // pred_fallthru
        _
      %p145 = scmp.lt.s32.totalorder %s12, 8
      // Predicated region
      $region13: #{tpu_custom_call.1} parent=5 // pred_check
        %p146 = pneg %p145
      $region14: #{tpu_custom_call.1} parent=5 // pred_check_branch
        %148 = sbr.rel (%p146) target = $region16
      $region15: #{tpu_custom_call.1} parent=5 // pred_region
        // Predicated region
        $region17: #{tpu_custom_call.1} parent=15 // pred_check
          %p149 = pneg %p46
        $region18: #{tpu_custom_call.1} parent=15 // pred_check_branch
          %151 = sbr.rel (%p149) target = $region20
        $region19: #{tpu_custom_call.1} parent=15 // pred_region
          %s152 = sand.u32 %s36, 1
          %s153 = scalar_lea.sflag [#allocation4], %s152
          %s154 = sand.u32 %s36, 1
          %s155 = smul.addr %s154, 8
          %s156 = scalar_lea.vmem [#allocation3], %s155
          %s158 = ssub.s32 128, 128
          %159 = vsyncadd %s153, %s158
          %s160 = smul.addr %s19, 4
          %s161 = sadd.s32 %s20, %s160
          %s162 = smul.addr %s161, 128
          %s163 = scalar_lea.hbm %s0, %s162
          %s165 = sshll.u32 %s156, 4
          %s166 = int_to_ptr.vmem [resolvable:$true] %s165
          %168 = dma.hbm_to_vmem [thread:$0]  %s163, 128, %s166, %s153
        $region20: #{tpu_custom_call.1} parent=15 // pred_fallthru
          _
        // Predicated region
        $region21: #{tpu_custom_call.1} parent=15 // pred_check
          %p169 = pneg %p72
        $region22: #{tpu_custom_call.1} parent=15 // pred_check_branch
          %171 = sbr.rel (%p169) target = $region24
        $region23: #{tpu_custom_call.1} parent=15 // pred_region
          %p172 = scmp.lt.s32.totalorder %s19, 1
          %s173 = scalar_select %p172, %s19, 1
          %s174 = smul.addr %s173, 8
          %s175 = scalar_lea.vmem %s1, %s174
        $region24: #{tpu_custom_call.1} parent=15 // pred_fallthru
          _
        // Predicated region
        $region25: #{tpu_custom_call.1} parent=15 // pred_check
          %p176 = pneg %p98
        $region26: #{tpu_custom_call.1} parent=15 // pred_check_branch
          %178 = sbr.rel (%p176) target = $region28
        $region27: #{tpu_custom_call.1} parent=15 // pred_region
          %p179 = scmp.lt.s32.totalorder %s19, 1
          %s180 = scalar_select %p179, %s19, 1
          %s181 = smul.addr %s180, 8
          %s182 = scalar_lea.vmem %s2, %s181
        $region28: #{tpu_custom_call.1} parent=15 // pred_fallthru
          _
      $region16: #{tpu_custom_call.1} parent=5 // pred_fallthru
        _
      %p183 = scmp.le.s32.totalorder 1, %s12
      %p184 = scmp.lt.s32.totalorder %s12, 9
      %p185 = pnand %p183, %p184
      %p186 = pneg %p185
      // Predicated region
      $region29: #{tpu_custom_call.1} parent=5 // pred_check
        _
      $region30: #{tpu_custom_call.1} parent=5 // pred_check_branch
        %188 = sbr.rel (%p185) target = $region32
      $region31: #{tpu_custom_call.1} parent=5 // pred_region
        %s189 = ssub.s32 %s12, 1
        %s190 = sand.u32 %s39, 1
        %s191 = scalar_lea.sflag [#allocation4], %s190
        %s192 = sand.u32 %s39, 1
        %s193 = smul.addr %s192, 8
        %s194 = scalar_lea.vmem [#allocation3], %s193
        // Predicated region
        $region33: #{tpu_custom_call.1} parent=31 // pred_check
          %p195 = pneg %p52
        $region34: #{tpu_custom_call.1} parent=31 // pred_check_branch
          %197 = sbr.rel (%p195) target = $region36
        $region35: #{tpu_custom_call.1} parent=31 // pred_region
          %198 = dma.done %s191, 128
        $region36: #{tpu_custom_call.1} parent=31 // pred_fallthru
          _
        %s199 = sand.u32 %s39, 1
        %s200 = scalar_lea.sflag [#allocation4], %s199
        %s201 = sand.u32 %s39, 1
        %s202 = smul.addr %s201, 8
        %s203 = scalar_lea.vmem [#allocation3], %s202
        %p204 = pneg %p52
        %p205 = pneg %p49
        %p206 = scmp.lt.s32.totalorder %s21, 1
        %s207 = scalar_select %p206, %s21, 1
        %s208 = smul.addr %s207, 8
        %s209 = scalar_lea.vmem %s1, %s208
        %p210 = pneg %p78
        %p211 = pneg %p75
        %p212 = scmp.lt.s32.totalorder %s21, 1
        %s213 = scalar_select %p212, %s21, 1
        %s214 = smul.addr %s213, 8
        %s215 = scalar_lea.vmem %s2, %s214
        %p216 = pneg %p104
        %p217 = pneg %p101
        %p218 = pneg %p130
        %p219 = pneg %p127
        %p220 = scmp.lt.s32.totalorder %s21, 1
        %s221 = scalar_select %p220, %s21, 1
        %s222 = smul.addr %s221, 8
        %s223 = scalar_lea.vmem %s3, %s222
        %p224 = scmp.lt.s32.totalorder %s21, 1
        %s225 = scalar_select %p224, %s21, 1
        %s226 = smul.addr %s225, 8
        %s227 = scalar_lea.vmem %s1, %s226
        %p228 = scmp.lt.s32.totalorder %s21, 1
        %s229 = scalar_select %p228, %s21, 1
        %s230 = smul.addr %s229, 8
        %s231 = scalar_lea.vmem %s2, %s230
        %p232 = scmp.lt.s32.totalorder %s21, 1
        %s233 = scalar_select %p232, %s21, 1
        %s234 = smul.addr %s233, 8
        %s235 = scalar_lea.vmem %s3, %s234
        %p236 = scmp.eq.s32.totalorder %s22, 0
        // Predicated region
        $region37: #{tpu_custom_call.1} parent=31 // pred_check
          %p237 = pneg %p236
        $region38: #{tpu_custom_call.1} parent=31 // pred_check_branch
          %239 = sbr.rel (%p237) target = $region40
        $region39: #{tpu_custom_call.1} parent=31 // pred_region
          %vm240 = vcmask 7168
          %241 = vst.msk [vmem:[#allocation2] sm:$0xff] %vm240, 0.0
        $region40: #{tpu_custom_call.1} parent=31 // pred_fallthru
          _
        %v242 = vld [vmem:[%s194] sm:$0xff]
        %v243 = vmax.f32 %v242, -1.0
        %v244 = vmin.f32 %v243, 1.0
        %v245 = vld [vmem:[%s227] sm:$0xff]
        %s246 = smul.u32 %s22, 128
        %v247 = vstv %s246
        %v248 = vsub.s32 %v245, %v247
        %v249 = vlaneseq
        %v250 = vand.u32 %v249, 127
        %251 = vset.pattern.permute.xlu0 0
        %252 = vperm.xlu0 %251, %v248
        %v253 = vpop.permute.xlu0 %252
        %vm254 = vcmp.eq.s32.totalorder %v250, %v253
        %v255 = vld [vmem:[%s231] sm:$0xff]
        %257 = vset.pattern.permute.xlu0 0
        %258 = vperm.xlu0 %257, %v255
        %v259 = vpop.permute.xlu0 %258
        %v261 = vsel %vm254, %v259, 0.0
        %v262 = vadd.f32 %v244, %v261
        %v263 = vld [vmem:[#allocation2] sm:$0xff]
        %v264 = vsub.f32 %v262, 1.0
        %v265 = vmul.f32 %v264, 30.0
        %v266 = vmul.f32 %v265, 1.442695
        %v267 = vpow.pop %v266
        %268 = vadd.xlane.f32.xlu0 %v267
        %v269 = vpop.xlane.xlu0 %268
        %v270 = vadd.f32 %v263, %v269
        %vm271 = vcmask 7168
        %272 = vst.msk [vmem:[#allocation2] sm:$0xff] %vm271, %v270
        %p273 = scmp.eq.s32.totalorder %s22, 3
        // Predicated region
        $region41: #{tpu_custom_call.1} parent=31 // pred_check
          %p274 = pneg %p273
        $region42: #{tpu_custom_call.1} parent=31 // pred_check_branch
          %276 = sbr.rel (%p274) target = $region44
        $region43: #{tpu_custom_call.1} parent=31 // pred_region
          %v277 = vld [vmem:[#allocation2] sm:$0xff]
          %v278 = vlog2.pop %v277
          %v279 = vmul.f32 %v278, 0.6931472
          %v280 = vadd.f32 %v279, 30.0
          %281 = vst.msk [vmem:[%s235] sm:$0xff] %vm271, %v280
        $region44: #{tpu_custom_call.1} parent=31 // pred_fallthru
          _
        %p282 = scmp.lt.s32.totalorder %s21, 1
        %s283 = scalar_select %p282, %s21, 1
        %s284 = smul.addr %s283, 8
        %s285 = scalar_lea.vmem %s3, %s284
        // Predicated region
        $region45: #{tpu_custom_call.1} parent=31 // pred_check
          %p286 = pneg %p127
        $region46: #{tpu_custom_call.1} parent=31 // pred_check_branch
          %288 = sbr.rel (%p286) target = $region48
        $region47: #{tpu_custom_call.1} parent=31 // pred_region
          _
        $region48: #{tpu_custom_call.1} parent=31 // pred_fallthru
          _
      $region32: #{tpu_custom_call.1} parent=5 // pred_fallthru
        _
      %p289 = scmp.le.s32.totalorder 2, %s12
      // Predicated region
      $region49: #{tpu_custom_call.1} parent=5 // pred_check
        %p290 = pneg %p289
      $region50: #{tpu_custom_call.1} parent=5 // pred_check_branch
        %292 = sbr.rel (%p290) target = $region52
      $region51: #{tpu_custom_call.1} parent=5 // pred_region
        %s293 = ssub.s32 %s12, 2
        // Predicated region
        $region53: #{tpu_custom_call.1} parent=51 // pred_check
          %p294 = pneg %p133
        $region54: #{tpu_custom_call.1} parent=51 // pred_check_branch
          %296 = sbr.rel (%p294) target = $region56
        $region55: #{tpu_custom_call.1} parent=51 // pred_region
          %p297 = scmp.lt.s32.totalorder %s23, 1
          %s298 = scalar_select %p297, %s23, 1
          %s299 = smul.addr %s298, 8
          %s300 = scalar_lea.vmem %s3, %s299
        $region56: #{tpu_custom_call.1} parent=51 // pred_fallthru
          _
      $region52: #{tpu_custom_call.1} parent=5 // pred_fallthru
        _
    $region6: #{tpu_custom_call.1} parent=1 // loop_footer
      %s16 = sadd.s32 1, %s12
    $region7: #{tpu_custom_call.1} parent=1 // loop_footer_branch
      %11 = sbr.rel target = $region3
    $region8: #{tpu_custom_call.1} parent=1 // loop_exit
      _
    %301 = vsyncpa [#allocation4], 1
    %s302 = scalar_lea.sflag [#allocation4], 1
    %303 = vsyncpa %s302, 1

</llo_original>
